<compile_context>
chip_gen: v6e
topology: v6e:2x2x1
jax: 0.10.0
libtpu: 0.0.40
codegen_flags: <defaults>
</compile_context>

<pallas_src>
import functools
import math

import jax
import jax.numpy as jnp
from jax import lax
from jax.experimental import pallas as pl
from jax.experimental.pallas import tpu as pltpu

LN_EPS = 1e-12


def _gelu(r):
    # tanh-approximate GELU, used identically in kernel and reference.
    c = 0.7978845608028654  # sqrt(2/pi)
    return 0.5 * r * (1.0 + jnp.tanh(c * (r + 0.044715 * r * r * r)))


@functools.lru_cache(maxsize=None)
def _vmem_limit_bytes():
    # ~3/4 of physical VMEM, capped at 96 MiB: ~96 MiB on v5e/v6e (128 MiB
    # physical), ~48 MiB on v7x (64 MiB physical).
    try:
        cap = pltpu.get_tpu_info().vmem_capacity_bytes
    except Exception:
        cap = 64 * 1024 * 1024
    return int(min(96 * 1024 * 1024, (cap * 3) // 4))


def _row_tile(M, target=256):
    """Bounded row tile: multiple of 8, divides M, <= target; prefer >=2 blocks."""
    if M <= target:
        if M % 16 == 0:
            return M // 2          # keep >=2 programs on the parallel M axis
        return M
    t = target
    while t >= 8:
        if M % t == 0:
            return t
        t -= 8
    return M


# --------------------------------------------------------------------------
# Kernel 1: embedding row-gather (manual DMA) + (pos + type) add + LayerNorm
# --------------------------------------------------------------------------
def _embed_kernel(ids_ref, wemb_hbm, pos_ref, g_ref, b_ref, o_ref, rows, sem,
                  *, tok_block):
    i = pl.program_id(0)
    base = i * tok_block
    # Gather tok_block word-embedding rows straight from HBM.
    # TODO(synk): could double-buffer across grid steps to hide DMA latency.
    copies = []
    for t in range(tok_block):
        tok = ids_ref[base + t]
        cp = pltpu.make_async_copy(wemb_hbm.at[pl.ds(tok, 1)],
                                   rows.at[pl.ds(t, 1)], sem.at[t])
        cp.start()
        copies.append(cp)
    for cp in copies:
        cp.wait()
    e = rows[...] + pos_ref[...]                      # (tok_block, D) f32
    mu = jnp.mean(e, axis=-1, keepdims=True)
    d = e - mu
    var = jnp.mean(d * d, axis=-1, keepdims=True)
    inv = lax.rsqrt(var + LN_EPS)
    o_ref[...] = (d * inv * g_ref[...] + b_ref[...]).astype(o_ref.dtype)


def embed_layernorm(ids_flat, word_emb, pos_type, gamma, beta, T):
    NT = ids_flat.shape[0]
    _, D = word_emb.shape
    tok = 8 if T % 8 == 0 else (4 if T % 4 == 0 else (2 if T % 2 == 0 else 1))
    kernel = functools.partial(_embed_kernel, tok_block=tok)
    return pl.pallas_call(
        kernel,
        out_shape=jax.ShapeDtypeStruct((NT, D), jnp.bfloat16),
        grid_spec=pltpu.PrefetchScalarGridSpec(
            num_scalar_prefetch=1,
            grid=(NT // tok,),
            in_specs=[
                pl.BlockSpec(memory_space=pl.ANY),               # (V, D) table in HBM
                pl.BlockSpec((tok, D), lambda i, ids: (i % (T // tok), 0)),
                pl.BlockSpec((1, D), lambda i, ids: (0, 0)),
                pl.BlockSpec((1, D), lambda i, ids: (0, 0)),
            ],
            out_specs=pl.BlockSpec((tok, D), lambda i, ids: (i, 0)),
            scratch_shapes=[
                pltpu.VMEM((tok, D), jnp.float32),
                pltpu.SemaphoreType.DMA((tok,)),
            ],
        ),
        compiler_params=pltpu.CompilerParams(
            dimension_semantics=("arbitrary",),
        ),
    )(ids_flat.astype(jnp.int32), word_emb, pos_type,
      gamma.reshape(1, D), beta.reshape(1, D))


# --------------------------------------------------------------------------
# Kernel 2: tiled matmul + bias (+ optional GELU), bf16 MXU, f32 accumulation
# --------------------------------------------------------------------------
def _matmul_kernel(x_ref, w_ref, b_ref, o_ref, acc_ref, *, activation):
    @pl.when(pl.program_id(2) == 0)
    def _():
        acc_ref[...] = jnp.zeros_like(acc_ref)

    acc_ref[...] += jnp.dot(x_ref[...], w_ref[...],
                            preferred_element_type=jnp.float32)

    @pl.when(pl.program_id(2) == pl.num_programs(2) - 1)
    def _():
        r = acc_ref[...] + b_ref[...]
        if activation == "gelu":
            r = _gelu(r)
        o_ref[...] = r.astype(o_ref.dtype)


def matmul_bias(x, w, b, activation="none", out_dtype=jnp.float32):
    M, K = x.shape
    K2, N = w.shape
    assert K == K2
    tm = _row_tile(M)
    tk = 256 if K % 256 == 0 else (128 if K % 128 == 0 else K)
    tn = 256 if N % 256 == 0 else (128 if N % 128 == 0 else N)
    grid = (M // tm, N // tn, K // tk)                  # K last (reduction)
    kernel = functools.partial(_matmul_kernel, activation=activation)
    return pl.pallas_call(
        kernel,
        out_shape=jax.ShapeDtypeStruct((M, N), out_dtype),
        grid_spec=pltpu.PrefetchScalarGridSpec(
            num_scalar_prefetch=0,
            grid=grid,
            in_specs=[
                pl.BlockSpec((tm, tk), lambda i, j, k: (i, k)),
                pl.BlockSpec((tk, tn), lambda i, j, k: (k, j)),
                pl.BlockSpec((1, tn), lambda i, j, k: (0, j)),
            ],
            out_specs=pl.BlockSpec((tm, tn), lambda i, j, k: (i, j)),
            scratch_shapes=[pltpu.VMEM((tm, tn), jnp.float32)],
        ),
        compiler_params=pltpu.CompilerParams(
            dimension_semantics=("parallel", "parallel", "arbitrary"),
            vmem_limit_bytes=_vmem_limit_bytes(),
        ),
    )(x, w, b.reshape(1, N).astype(jnp.float32))


# --------------------------------------------------------------------------
# Kernel 3: matmul + bias + residual-add + LayerNorm fused epilogue (tn = D)
# --------------------------------------------------------------------------
def _matmul_ln_kernel(x_ref, w_ref, b_ref, r_ref, g_ref, bn_ref, o_ref, acc_ref):
    @pl.when(pl.program_id(1) == 0)
    def _():
        acc_ref[...] = jnp.zeros_like(acc_ref)

    acc_ref[...] += jnp.dot(x_ref[...], w_ref[...],
                            preferred_element_type=jnp.float32)

    @pl.when(pl.program_id(1) == pl.num_programs(1) - 1)
    def _():
        h = acc_ref[...] + b_ref[...] + r_ref[...].astype(jnp.float32)
        mu = jnp.mean(h, axis=-1, keepdims=True)
        d = h - mu
        var = jnp.mean(d * d, axis=-1, keepdims=True)
        inv = lax.rsqrt(var + LN_EPS)
        o_ref[...] = (d * inv * g_ref[...] + bn_ref[...]).astype(o_ref.dtype)


def matmul_bias_residual_ln(x, w, b, resid, gamma, beta, out_dtype=jnp.bfloat16):
    M, K = x.shape
    K2, D = w.shape
    assert K == K2 and resid.shape == (M, D)
    tm = _row_tile(M)
    tk = 256 if K % 256 == 0 else (128 if K % 128 == 0 else K)
    grid = (M // tm, K // tk)
    return pl.pallas_call(
        _matmul_ln_kernel,
        out_shape=jax.ShapeDtypeStruct((M, D), out_dtype),
        grid_spec=pltpu.PrefetchScalarGridSpec(
            num_scalar_prefetch=0,
            grid=grid,
            in_specs=[
                pl.BlockSpec((tm, tk), lambda i, k: (i, k)),
                pl.BlockSpec((tk, D), lambda i, k: (k, 0)),
                pl.BlockSpec((1, D), lambda i, k: (0, 0)),
                pl.BlockSpec((tm, D), lambda i, k: (i, 0)),
                pl.BlockSpec((1, D), lambda i, k: (0, 0)),
                pl.BlockSpec((1, D), lambda i, k: (0, 0)),
            ],
            out_specs=pl.BlockSpec((tm, D), lambda i, k: (i, 0)),
            scratch_shapes=[pltpu.VMEM((tm, D), jnp.float32)],
        ),
        compiler_params=pltpu.CompilerParams(
            dimension_semantics=("parallel", "arbitrary"),
            vmem_limit_bytes=_vmem_limit_bytes(),
        ),
    )(x, w, b.reshape(1, D).astype(jnp.float32), resid,
      gamma.reshape(1, D).astype(jnp.float32),
      beta.reshape(1, D).astype(jnp.float32))


# --------------------------------------------------------------------------
# Kernel 4: softmax attention reading (NT, 3D)-layout qkv directly
# --------------------------------------------------------------------------
def _attention_kernel(q_ref, k_ref, v_ref, o_ref, *, heads_per_block, dh):
    # q_ref/k_ref/v_ref/o_ref: (T, heads_per_block * dh)
    # TODO(synk): switch to flash-style online-softmax KV tiling once T >= ~256.
    scale = 1.0 / math.sqrt(dh)
    outs = []
    for hb in range(heads_per_block):
        c = pl.ds(hb * dh, dh)
        q = q_ref[:, c]
        k = k_ref[:, c]
        v = v_ref[:, c]
        s = lax.dot_general(q, k, (((1,), (1,)), ((), ())),       # q @ k^T
                            preferred_element_type=jnp.float32) * scale
        m = jnp.max(s, axis=-1, keepdims=True)
        p = jnp.exp(s - m)
        p = p * pl.reciprocal(jnp.sum(p, axis=-1, keepdims=True), approx=True)
        outs.append(jnp.dot(p.astype(v.dtype), v,
                            preferred_element_type=jnp.float32))
    o_ref[...] = jnp.concatenate(outs, axis=-1).astype(o_ref.dtype)


def attention_from_qkv(qkv, N, T, H, dh):
    D = H * dh
    # Pick the smallest head group whose column width is a 128-lane multiple.
    hb = None
    for cand in range(1, H + 1):
        if H % cand == 0 and (cand * dh) % 128 == 0:
            hb = cand
            break
    assert hb is not None, "head_dim must pack into 128-lane column blocks"
    gH = H // hb
    cw = hb * dh
    kernel = functools.partial(_attention_kernel, heads_per_block=hb, dh=dh)
    return pl.pallas_call(
        kernel,
        out_shape=jax.ShapeDtypeStruct((N * T, D), qkv.dtype),
        grid_spec=pltpu.PrefetchScalarGridSpec(
            num_scalar_prefetch=0,
            grid=(N, gH),
            in_specs=[
                pl.BlockSpec((T, cw), lambda n, g: (n, g)),            # Q cols
                pl.BlockSpec((T, cw), lambda n, g: (n, gH + g)),       # K cols
                pl.BlockSpec((T, cw), lambda n, g: (n, 2 * gH + g)),   # V cols
            ],
            out_specs=pl.BlockSpec((T, cw), lambda n, g: (n, g)),
        ),
        compiler_params=pltpu.CompilerParams(
            dimension_semantics=("parallel", "parallel"),
        ),
    )(qkv, qkv, qkv)


# --------------------------------------------------------------------------
# BertRegression forward (eval mode): bert(x)[0] -> fc -> squeeze, returns (out, y)
# --------------------------------------------------------------------------
def bert_regression_forward(params, x, y, cfg):
    N, T = x.shape
    D, H = cfg["hidden"], cfg["heads"]
    dh = D // H
    NT = N * T

    ids = x.reshape(NT).astype(jnp.int32)
    pos_type = (params["pos_emb"][:T] + params["type_emb"]).astype(jnp.float32)

    # (NT, D) bf16 activations between kernels; LN math stays f32 in-kernel.
    h = embed_layernorm(ids, params["word_emb"], pos_type,
                        params["emb_ln_g"], params["emb_ln_b"], T)

    for layer in params["layers"]:
        # --- multi-head self attention (no XLA reshape/transpose round trips) ---
        qkv = matmul_bias(h, layer["w_qkv_bf16"], layer["b_qkv"],
                          out_dtype=jnp.bfloat16)                  # (NT, 3D)
        ctx = attention_from_qkv(qkv, N, T, H, dh)                 # (NT, D)
        h = matmul_bias_residual_ln(ctx, layer["w_o_bf16"], layer["b_o"],
                                    h, layer["ln1_g"], layer["ln1_b"])
        # --- feed forward ---
        ffn = matmul_bias(h, layer["w_ff1_bf16"], layer["b_ff1"],
                          activation="gelu", out_dtype=jnp.bfloat16)
        h = matmul_bias_residual_ln(ffn, layer["w_ff2_bf16"], layer["b_ff2"],
                                    h, layer["ln2_g"], layer["ln2_b"])

    # regression head: Linear(D, 1).squeeze(); output column padded to 128
    # lanes inside the kernel (lane-dense store), sliced back outside.
    out_pad = matmul_bias(h, params["w_fc_pad_bf16"], params["b_fc_pad"],
                          out_dtype=jnp.float32)                   # (NT, 128)
    out = out_pad[:, 0].reshape(N, T)
    return out, y


# --------------------------------------------------------------------------
# deterministic parameter init + pure-JAX reference
# --------------------------------------------------------------------------
def init_params(key, cfg):
    D, Hff, V = cfg["hidden"], cfg["ffn"], cfg["vocab"]
    L, P = cfg["layers"], cfg["max_pos"]
    std = 0.02
    keys = jax.random.split(key, 4 + L)

    def nrm(k, shape):
        return (std * jax.random.normal(k, shape)).astype(jnp.float32)

    params = {
        "word_emb": nrm(keys[0], (V, D)),
        "pos_emb": nrm(keys[1], (P, D)),
        "type_emb": nrm(keys[2], (1, D)),
        "emb_ln_g": jnp.ones((D,), jnp.float32),
        "emb_ln_b": jnp.zeros((D,), jnp.float32),
        "layers": [],
    }
    for l in range(L):
        lk = jax.random.split(keys[4 + l], 8)
        layer = {
            "w_qkv": nrm(lk[0], (D, 3 * D)), "b_qkv": nrm(lk[1], (3 * D,)),
            "w_o": nrm(lk[2], (D, D)), "b_o": nrm(lk[3], (D,)),
            "ln1_g": jnp.ones((D,), jnp.float32),
            "ln1_b": jnp.zeros((D,), jnp.float32),
            "w_ff1": nrm(lk[4], (D, Hff)), "b_ff1": nrm(lk[5], (Hff,)),
            "w_ff2": nrm(lk[6], (Hff, D)), "b_ff2": nrm(lk[7], (D,)),
            "ln2_g": jnp.ones((D,), jnp.float32),
            "ln2_b": jnp.zeros((D,), jnp.float32),
        }
        # bf16 copies feed the MXU; f32 originals are kept for the reference.
        for name in ("w_qkv", "w_o", "w_ff1", "w_ff2"):
            layer[name + "_bf16"] = layer[name].astype(jnp.bfloat16)
        params["layers"].append(layer)
    kw, kb = jax.random.split(keys[3], 2)
    w_fc = nrm(kw, (D, 1))
    b_fc = nrm(kb, (1,))
    params["w_fc"] = w_fc
    params["b_fc"] = b_fc
    params["w_fc_pad"] = jnp.pad(w_fc, ((0, 0), (0, 127)))   # lane-dense fc output
    params["b_fc_pad"] = jnp.pad(b_fc, (0, 127))
    params["w_fc_pad_bf16"] = params["w_fc_pad"].astype(jnp.bfloat16)
    return params


def reference_forward(params, x, y, cfg):
    N, T = x.shape
    D, H = cfg["hidden"], cfg["heads"]
    dh = D // H
    NT = N * T
    hp = lax.Precision.HIGHEST

    def layernorm(v, g, b):
        mu = jnp.mean(v, axis=-1, keepdims=True)
        d = v - mu
        var = jnp.mean(d * d, axis=-1, keepdims=True)
        return d * lax.rsqrt(var + LN_EPS) * g + b

    ids = x.reshape(NT)
    pos_type = params["pos_emb"][:T] + params["type_emb"]
    e = params["word_emb"][ids] + jnp.tile(pos_type, (N, 1))
    h = layernorm(e, params["emb_ln_g"], params["emb_ln_b"])

    for layer in params["layers"]:
        qkv = jnp.dot(h, layer["w_qkv"], precision=hp) + layer["b_qkv"]
        qkv = qkv.reshape(N, T, 3, H, dh).transpose(2, 0, 3, 1, 4)
        q, k, v = qkv[0], qkv[1], qkv[2]                   # (N, H, T, dh)
        s = jnp.einsum("nhqd,nhkd->nhqk", q, k, precision=hp) / math.sqrt(dh)
        p = jax.nn.softmax(s, axis=-1)
        ctx = jnp.einsum("nhqk,nhkd->nhqd", p, v, precision=hp)
        ctx = ctx.transpose(0, 2, 1, 3).reshape(NT, D)
        attn_out = jnp.dot(ctx, layer["w_o"], precision=hp) + layer["b_o"]
        h = layernorm(attn_out + h, layer["ln1_g"], layer["ln1_b"])
        ffn = _gelu(jnp.dot(h, layer["w_ff1"], precision=hp) + layer["b_ff1"])
        ffn = jnp.dot(ffn, layer["w_ff2"], precision=hp) + layer["b_ff2"]
        h = layernorm(ffn + h, layer["ln2_g"], layer["ln2_b"])

    out = (jnp.dot(h, params["w_fc"], precision=hp) + params["b_fc"]).squeeze(-1)
    return out.reshape(N, T), y


if __name__ == "__main__":
    # Small, deterministic BERT-style config (bert-base uses D=768,H=12,L=12).
    cfg = dict(hidden=256, heads=4, ffn=1024, vocab=512, max_pos=64, layers=2)
    N, T = 2, 8

    key = jax.random.PRNGKey(0)
    kp, kx, ky = jax.random.split(key, 3)
    params = init_params(kp, cfg)

    x = jax.random.randint(kx, (N, T), 0, cfg["vocab"], dtype=jnp.int32)
    # y is only echoed back by the module (int32 here; torch used int64)
    y = jax.random.randint(ky, (N, T), 0, 10, dtype=jnp.int32)

    out, y_out = bert_regression_forward(params, x, y, cfg)
    jax.block_until_ready((out, y_out))

    ref_out, _ = reference_forward(params, x, y, cfg)

    assert out.shape == (N, T) and out.dtype == jnp.float32
    assert jnp.array_equal(y_out, y)
    max_err = float(jnp.max(jnp.abs(out - ref_out)))
    assert jnp.allclose(out, ref_out, atol=2e-2, rtol=2e-2), max_err

    print("KERNEL_OK")
</pallas_src>

<mosaic_0001>
module attributes {stable_mosaic.version = 11 : i64} {
  func.func @_embed_kernel(%arg0: i32, %arg1: memref<16xi32, #tpu.memory_space<smem>>, %arg2: memref<512x256xf32, #tpu.memory_space<any>>, %arg3: memref<8x256xf32, #tpu.memory_space<vmem>>, %arg4: memref<1x256xf32, #tpu.memory_space<vmem>>, %arg5: memref<1x256xf32, #tpu.memory_space<vmem>>, %arg6: memref<8x256xbf16, #tpu.memory_space<vmem>>, %arg7: memref<8x256xf32, #tpu.memory_space<vmem>>, %arg8: memref<8x!tpu.dma_semaphore, #tpu.memory_space<semaphore_mem>>) attributes {dimension_semantics = [#tpu.dimension_semantics<arbitrary>], iteration_bounds = array<i64: 2>, scalar_prefetch = 1 : i64, scratch_operands = 2 : i64, tpu.core_type = #tpu.core_type<tc>, window_params = [{}, {transform_indices = @transform_1, window_bounds = array<i64: 8, 256>}, {pipeline_mode = #tpu.pipeline_mode<synchronous>, transform_indices = @transform_2, window_bounds = array<i64: 1, 256>}, {pipeline_mode = #tpu.pipeline_mode<synchronous>, transform_indices = @transform_3, window_bounds = array<i64: 1, 256>}, {transform_indices = @transform_4, window_bounds = array<i64: 8, 256>}]} {
    %c8_i32 = arith.constant 8 : i32
    %0 = arith.muli %arg0, %c8_i32 : i32
    %c0_i32 = arith.constant 0 : i32
    %1 = arith.addi %0, %c0_i32 : i32
    %2 = arith.index_cast %1 : i32 to index
    %3 = memref.load %arg1[%2] : memref<16xi32, #tpu.memory_space<smem>>
    %c0_i32_0 = arith.constant 0 : i32
    %c0_i32_1 = arith.constant 0 : i32
    %4 = tpu.memref_slice %arg2[%3, %c0_i32_1] : memref<512x256xf32, #tpu.memory_space<any>> -> memref<1x256xf32, #tpu.memory_space<any>>
    %c0_i32_2 = arith.constant 0 : i32
    %c0_i32_3 = arith.constant 0 : i32
    %5 = tpu.memref_slice %arg7[%c0_i32_2, %c0_i32_3] : memref<8x256xf32, #tpu.memory_space<vmem>> -> memref<1x256xf32, #tpu.memory_space<vmem>>
    %6 = tpu.memref_slice %arg8[%c0_i32_0] : memref<8x!tpu.dma_semaphore, #tpu.memory_space<semaphore_mem>> -> memref<1x!tpu.dma_semaphore, #tpu.memory_space<semaphore_mem>>
    %7 = tpu.memref_squeeze %6 : memref<1x!tpu.dma_semaphore, #tpu.memory_space<semaphore_mem>> -> memref<!tpu.dma_semaphore, #tpu.memory_space<semaphore_mem>>
    tpu.enqueue_dma source(%4 : memref<1x256xf32, #tpu.memory_space<any>>) target(%5 : memref<1x256xf32, #tpu.memory_space<vmem>>) target_semaphore(%7 : memref<!tpu.dma_semaphore, #tpu.memory_space<semaphore_mem>>)
    %c1_i32 = arith.constant 1 : i32
    %8 = arith.addi %0, %c1_i32 : i32
    %9 = arith.index_cast %8 : i32 to index
    %10 = memref.load %arg1[%9] : memref<16xi32, #tpu.memory_space<smem>>
    %c1_i32_4 = arith.constant 1 : i32
    %c0_i32_5 = arith.constant 0 : i32
    %11 = tpu.memref_slice %arg2[%10, %c0_i32_5] : memref<512x256xf32, #tpu.memory_space<any>> -> memref<1x256xf32, #tpu.memory_space<any>>
    %c1_i32_6 = arith.constant 1 : i32
    %c0_i32_7 = arith.constant 0 : i32
    %12 = tpu.memref_slice %arg7[%c1_i32_6, %c0_i32_7] : memref<8x256xf32, #tpu.memory_space<vmem>> -> memref<1x256xf32, #tpu.memory_space<vmem>>
    %13 = tpu.memref_slice %arg8[%c1_i32_4] : memref<8x!tpu.dma_semaphore, #tpu.memory_space<semaphore_mem>> -> memref<1x!tpu.dma_semaphore, #tpu.memory_space<semaphore_mem>>
    %14 = tpu.memref_squeeze %13 : memref<1x!tpu.dma_semaphore, #tpu.memory_space<semaphore_mem>> -> memref<!tpu.dma_semaphore, #tpu.memory_space<semaphore_mem>>
    tpu.enqueue_dma source(%11 : memref<1x256xf32, #tpu.memory_space<any>>) target(%12 : memref<1x256xf32, #tpu.memory_space<vmem>>) target_semaphore(%14 : memref<!tpu.dma_semaphore, #tpu.memory_space<semaphore_mem>>)
    %c2_i32 = arith.constant 2 : i32
    %15 = arith.addi %0, %c2_i32 : i32
    %16 = arith.index_cast %15 : i32 to index
    %17 = memref.load %arg1[%16] : memref<16xi32, #tpu.memory_space<smem>>
    %c2_i32_8 = arith.constant 2 : i32
    %c0_i32_9 = arith.constant 0 : i32
    %18 = tpu.memref_slice %arg2[%17, %c0_i32_9] : memref<512x256xf32, #tpu.memory_space<any>> -> memref<1x256xf32, #tpu.memory_space<any>>
    %c2_i32_10 = arith.constant 2 : i32
    %c0_i32_11 = arith.constant 0 : i32
    %19 = tpu.memref_slice %arg7[%c2_i32_10, %c0_i32_11] : memref<8x256xf32, #tpu.memory_space<vmem>> -> memref<1x256xf32, #tpu.memory_space<vmem>>
    %20 = tpu.memref_slice %arg8[%c2_i32_8] : memref<8x!tpu.dma_semaphore, #tpu.memory_space<semaphore_mem>> -> memref<1x!tpu.dma_semaphore, #tpu.memory_space<semaphore_mem>>
    %21 = tpu.memref_squeeze %20 : memref<1x!tpu.dma_semaphore, #tpu.memory_space<semaphore_mem>> -> memref<!tpu.dma_semaphore, #tpu.memory_space<semaphore_mem>>
    tpu.enqueue_dma source(%18 : memref<1x256xf32, #tpu.memory_space<any>>) target(%19 : memref<1x256xf32, #tpu.memory_space<vmem>>) target_semaphore(%21 : memref<!tpu.dma_semaphore, #tpu.memory_space<semaphore_mem>>)
    %c3_i32 = arith.constant 3 : i32
    %22 = arith.addi %0, %c3_i32 : i32
    %23 = arith.index_cast %22 : i32 to index
    %24 = memref.load %arg1[%23] : memref<16xi32, #tpu.memory_space<smem>>
    %c3_i32_12 = arith.constant 3 : i32
    %c0_i32_13 = arith.constant 0 : i32
    %25 = tpu.memref_slice %arg2[%24, %c0_i32_13] : memref<512x256xf32, #tpu.memory_space<any>> -> memref<1x256xf32, #tpu.memory_space<any>>
    %c3_i32_14 = arith.constant 3 : i32
    %c0_i32_15 = arith.constant 0 : i32
    %26 = tpu.memref_slice %arg7[%c3_i32_14, %c0_i32_15] : memref<8x256xf32, #tpu.memory_space<vmem>> -> memref<1x256xf32, #tpu.memory_space<vmem>>
    %27 = tpu.memref_slice %arg8[%c3_i32_12] : memref<8x!tpu.dma_semaphore, #tpu.memory_space<semaphore_mem>> -> memref<1x!tpu.dma_semaphore, #tpu.memory_space<semaphore_mem>>
    %28 = tpu.memref_squeeze %27 : memref<1x!tpu.dma_semaphore, #tpu.memory_space<semaphore_mem>> -> memref<!tpu.dma_semaphore, #tpu.memory_space<semaphore_mem>>
    tpu.enqueue_dma source(%25 : memref<1x256xf32, #tpu.memory_space<any>>) target(%26 : memref<1x256xf32, #tpu.memory_space<vmem>>) target_semaphore(%28 : memref<!tpu.dma_semaphore, #tpu.memory_space<semaphore_mem>>)
    %c4_i32 = arith.constant 4 : i32
    %29 = arith.addi %0, %c4_i32 : i32
    %30 = arith.index_cast %29 : i32 to index
    %31 = memref.load %arg1[%30] : memref<16xi32, #tpu.memory_space<smem>>
    %c4_i32_16 = arith.constant 4 : i32
    %c0_i32_17 = arith.constant 0 : i32
    %32 = tpu.memref_slice %arg2[%31, %c0_i32_17] : memref<512x256xf32, #tpu.memory_space<any>> -> memref<1x256xf32, #tpu.memory_space<any>>
    %c4_i32_18 = arith.constant 4 : i32
    %c0_i32_19 = arith.constant 0 : i32
    %33 = tpu.memref_slice %arg7[%c4_i32_18, %c0_i32_19] : memref<8x256xf32, #tpu.memory_space<vmem>> -> memref<1x256xf32, #tpu.memory_space<vmem>>
    %34 = tpu.memref_slice %arg8[%c4_i32_16] : memref<8x!tpu.dma_semaphore, #tpu.memory_space<semaphore_mem>> -> memref<1x!tpu.dma_semaphore, #tpu.memory_space<semaphore_mem>>
    %35 = tpu.memref_squeeze %34 : memref<1x!tpu.dma_semaphore, #tpu.memory_space<semaphore_mem>> -> memref<!tpu.dma_semaphore, #tpu.memory_space<semaphore_mem>>
    tpu.enqueue_dma source(%32 : memref<1x256xf32, #tpu.memory_space<any>>) target(%33 : memref<1x256xf32, #tpu.memory_space<vmem>>) target_semaphore(%35 : memref<!tpu.dma_semaphore, #tpu.memory_space<semaphore_mem>>)
    %c5_i32 = arith.constant 5 : i32
    %36 = arith.addi %0, %c5_i32 : i32
    %37 = arith.index_cast %36 : i32 to index
    %38 = memref.load %arg1[%37] : memref<16xi32, #tpu.memory_space<smem>>
    %c5_i32_20 = arith.constant 5 : i32
    %c0_i32_21 = arith.constant 0 : i32
    %39 = tpu.memref_slice %arg2[%38, %c0_i32_21] : memref<512x256xf32, #tpu.memory_space<any>> -> memref<1x256xf32, #tpu.memory_space<any>>
    %c5_i32_22 = arith.constant 5 : i32
    %c0_i32_23 = arith.constant 0 : i32
    %40 = tpu.memref_slice %arg7[%c5_i32_22, %c0_i32_23] : memref<8x256xf32, #tpu.memory_space<vmem>> -> memref<1x256xf32, #tpu.memory_space<vmem>>
    %41 = tpu.memref_slice %arg8[%c5_i32_20] : memref<8x!tpu.dma_semaphore, #tpu.memory_space<semaphore_mem>> -> memref<1x!tpu.dma_semaphore, #tpu.memory_space<semaphore_mem>>
    %42 = tpu.memref_squeeze %41 : memref<1x!tpu.dma_semaphore, #tpu.memory_space<semaphore_mem>> -> memref<!tpu.dma_semaphore, #tpu.memory_space<semaphore_mem>>
    tpu.enqueue_dma source(%39 : memref<1x256xf32, #tpu.memory_space<any>>) target(%40 : memref<1x256xf32, #tpu.memory_space<vmem>>) target_semaphore(%42 : memref<!tpu.dma_semaphore, #tpu.memory_space<semaphore_mem>>)
    %c6_i32 = arith.constant 6 : i32
    %43 = arith.addi %0, %c6_i32 : i32
    %44 = arith.index_cast %43 : i32 to index
    %45 = memref.load %arg1[%44] : memref<16xi32, #tpu.memory_space<smem>>
    %c6_i32_24 = arith.constant 6 : i32
    %c0_i32_25 = arith.constant 0 : i32
    %46 = tpu.memref_slice %arg2[%45, %c0_i32_25] : memref<512x256xf32, #tpu.memory_space<any>> -> memref<1x256xf32, #tpu.memory_space<any>>
    %c6_i32_26 = arith.constant 6 : i32
    %c0_i32_27 = arith.constant 0 : i32
    %47 = tpu.memref_slice %arg7[%c6_i32_26, %c0_i32_27] : memref<8x256xf32, #tpu.memory_space<vmem>> -> memref<1x256xf32, #tpu.memory_space<vmem>>
    %48 = tpu.memref_slice %arg8[%c6_i32_24] : memref<8x!tpu.dma_semaphore, #tpu.memory_space<semaphore_mem>> -> memref<1x!tpu.dma_semaphore, #tpu.memory_space<semaphore_mem>>
    %49 = tpu.memref_squeeze %48 : memref<1x!tpu.dma_semaphore, #tpu.memory_space<semaphore_mem>> -> memref<!tpu.dma_semaphore, #tpu.memory_space<semaphore_mem>>
    tpu.enqueue_dma source(%46 : memref<1x256xf32, #tpu.memory_space<any>>) target(%47 : memref<1x256xf32, #tpu.memory_space<vmem>>) target_semaphore(%49 : memref<!tpu.dma_semaphore, #tpu.memory_space<semaphore_mem>>)
    %c7_i32 = arith.constant 7 : i32
    %50 = arith.addi %0, %c7_i32 : i32
    %51 = arith.index_cast %50 : i32 to index
    %52 = memref.load %arg1[%51] : memref<16xi32, #tpu.memory_space<smem>>
    %c7_i32_28 = arith.constant 7 : i32
    %c0_i32_29 = arith.constant 0 : i32
    %53 = tpu.memref_slice %arg2[%52, %c0_i32_29] : memref<512x256xf32, #tpu.memory_space<any>> -> memref<1x256xf32, #tpu.memory_space<any>>
    %c7_i32_30 = arith.constant 7 : i32
    %c0_i32_31 = arith.constant 0 : i32
    %54 = tpu.memref_slice %arg7[%c7_i32_30, %c0_i32_31] : memref<8x256xf32, #tpu.memory_space<vmem>> -> memref<1x256xf32, #tpu.memory_space<vmem>>
    %55 = tpu.memref_slice %arg8[%c7_i32_28] : memref<8x!tpu.dma_semaphore, #tpu.memory_space<semaphore_mem>> -> memref<1x!tpu.dma_semaphore, #tpu.memory_space<semaphore_mem>>
    %56 = tpu.memref_squeeze %55 : memref<1x!tpu.dma_semaphore, #tpu.memory_space<semaphore_mem>> -> memref<!tpu.dma_semaphore, #tpu.memory_space<semaphore_mem>>
    tpu.enqueue_dma source(%53 : memref<1x256xf32, #tpu.memory_space<any>>) target(%54 : memref<1x256xf32, #tpu.memory_space<vmem>>) target_semaphore(%56 : memref<!tpu.dma_semaphore, #tpu.memory_space<semaphore_mem>>)
    %c0_i32_32 = arith.constant 0 : i32
    %c0_i32_33 = arith.constant 0 : i32
    %57 = tpu.memref_slice %arg2[%3, %c0_i32_33] : memref<512x256xf32, #tpu.memory_space<any>> -> memref<1x256xf32, #tpu.memory_space<any>>
    %c0_i32_34 = arith.constant 0 : i32
    %c0_i32_35 = arith.constant 0 : i32
    %58 = tpu.memref_slice %arg7[%c0_i32_34, %c0_i32_35] : memref<8x256xf32, #tpu.memory_space<vmem>> -> memref<1x256xf32, #tpu.memory_space<vmem>>
    %59 = tpu.memref_slice %arg8[%c0_i32_32] : memref<8x!tpu.dma_semaphore, #tpu.memory_space<semaphore_mem>> -> memref<1x!tpu.dma_semaphore, #tpu.memory_space<semaphore_mem>>
    %60 = tpu.memref_squeeze %59 : memref<1x!tpu.dma_semaphore, #tpu.memory_space<semaphore_mem>> -> memref<!tpu.dma_semaphore, #tpu.memory_space<semaphore_mem>>
    tpu.wait_dma2 semaphore(%60 : memref<!tpu.dma_semaphore, #tpu.memory_space<semaphore_mem>>) src(%57 : memref<1x256xf32, #tpu.memory_space<any>>) dst(%58 : memref<1x256xf32, #tpu.memory_space<vmem>>)
    %c1_i32_36 = arith.constant 1 : i32
    %c0_i32_37 = arith.constant 0 : i32
    %61 = tpu.memref_slice %arg2[%10, %c0_i32_37] : memref<512x256xf32, #tpu.memory_space<any>> -> memref<1x256xf32, #tpu.memory_space<any>>
    %c1_i32_38 = arith.constant 1 : i32
    %c0_i32_39 = arith.constant 0 : i32
    %62 = tpu.memref_slice %arg7[%c1_i32_38, %c0_i32_39] : memref<8x256xf32, #tpu.memory_space<vmem>> -> memref<1x256xf32, #tpu.memory_space<vmem>>
    %63 = tpu.memref_slice %arg8[%c1_i32_36] : memref<8x!tpu.dma_semaphore, #tpu.memory_space<semaphore_mem>> -> memref<1x!tpu.dma_semaphore, #tpu.memory_space<semaphore_mem>>
    %64 = tpu.memref_squeeze %63 : memref<1x!tpu.dma_semaphore, #tpu.memory_space<semaphore_mem>> -> memref<!tpu.dma_semaphore, #tpu.memory_space<semaphore_mem>>
    tpu.wait_dma2 semaphore(%64 : memref<!tpu.dma_semaphore, #tpu.memory_space<semaphore_mem>>) src(%61 : memref<1x256xf32, #tpu.memory_space<any>>) dst(%62 : memref<1x256xf32, #tpu.memory_space<vmem>>)
    %c2_i32_40 = arith.constant 2 : i32
    %c0_i32_41 = arith.constant 0 : i32
    %65 = tpu.memref_slice %arg2[%17, %c0_i32_41] : memref<512x256xf32, #tpu.memory_space<any>> -> memref<1x256xf32, #tpu.memory_space<any>>
    %c2_i32_42 = arith.constant 2 : i32
    %c0_i32_43 = arith.constant 0 : i32
    %66 = tpu.memref_slice %arg7[%c2_i32_42, %c0_i32_43] : memref<8x256xf32, #tpu.memory_space<vmem>> -> memref<1x256xf32, #tpu.memory_space<vmem>>
    %67 = tpu.memref_slice %arg8[%c2_i32_40] : memref<8x!tpu.dma_semaphore, #tpu.memory_space<semaphore_mem>> -> memref<1x!tpu.dma_semaphore, #tpu.memory_space<semaphore_mem>>
    %68 = tpu.memref_squeeze %67 : memref<1x!tpu.dma_semaphore, #tpu.memory_space<semaphore_mem>> -> memref<!tpu.dma_semaphore, #tpu.memory_space<semaphore_mem>>
    tpu.wait_dma2 semaphore(%68 : memref<!tpu.dma_semaphore, #tpu.memory_space<semaphore_mem>>) src(%65 : memref<1x256xf32, #tpu.memory_space<any>>) dst(%66 : memref<1x256xf32, #tpu.memory_space<vmem>>)
    %c3_i32_44 = arith.constant 3 : i32
    %c0_i32_45 = arith.constant 0 : i32
    %69 = tpu.memref_slice %arg2[%24, %c0_i32_45] : memref<512x256xf32, #tpu.memory_space<any>> -> memref<1x256xf32, #tpu.memory_space<any>>
    %c3_i32_46 = arith.constant 3 : i32
    %c0_i32_47 = arith.constant 0 : i32
    %70 = tpu.memref_slice %arg7[%c3_i32_46, %c0_i32_47] : memref<8x256xf32, #tpu.memory_space<vmem>> -> memref<1x256xf32, #tpu.memory_space<vmem>>
    %71 = tpu.memref_slice %arg8[%c3_i32_44] : memref<8x!tpu.dma_semaphore, #tpu.memory_space<semaphore_mem>> -> memref<1x!tpu.dma_semaphore, #tpu.memory_space<semaphore_mem>>
    %72 = tpu.memref_squeeze %71 : memref<1x!tpu.dma_semaphore, #tpu.memory_space<semaphore_mem>> -> memref<!tpu.dma_semaphore, #tpu.memory_space<semaphore_mem>>
    tpu.wait_dma2 semaphore(%72 : memref<!tpu.dma_semaphore, #tpu.memory_space<semaphore_mem>>) src(%69 : memref<1x256xf32, #tpu.memory_space<any>>) dst(%70 : memref<1x256xf32, #tpu.memory_space<vmem>>)
    %c4_i32_48 = arith.constant 4 : i32
    %c0_i32_49 = arith.constant 0 : i32
    %73 = tpu.memref_slice %arg2[%31, %c0_i32_49] : memref<512x256xf32, #tpu.memory_space<any>> -> memref<1x256xf32, #tpu.memory_space<any>>
    %c4_i32_50 = arith.constant 4 : i32
    %c0_i32_51 = arith.constant 0 : i32
    %74 = tpu.memref_slice %arg7[%c4_i32_50, %c0_i32_51] : memref<8x256xf32, #tpu.memory_space<vmem>> -> memref<1x256xf32, #tpu.memory_space<vmem>>
    %75 = tpu.memref_slice %arg8[%c4_i32_48] : memref<8x!tpu.dma_semaphore, #tpu.memory_space<semaphore_mem>> -> memref<1x!tpu.dma_semaphore, #tpu.memory_space<semaphore_mem>>
    %76 = tpu.memref_squeeze %75 : memref<1x!tpu.dma_semaphore, #tpu.memory_space<semaphore_mem>> -> memref<!tpu.dma_semaphore, #tpu.memory_space<semaphore_mem>>
    tpu.wait_dma2 semaphore(%76 : memref<!tpu.dma_semaphore, #tpu.memory_space<semaphore_mem>>) src(%73 : memref<1x256xf32, #tpu.memory_space<any>>) dst(%74 : memref<1x256xf32, #tpu.memory_space<vmem>>)
    %c5_i32_52 = arith.constant 5 : i32
    %c0_i32_53 = arith.constant 0 : i32
    %77 = tpu.memref_slice %arg2[%38, %c0_i32_53] : memref<512x256xf32, #tpu.memory_space<any>> -> memref<1x256xf32, #tpu.memory_space<any>>
    %c5_i32_54 = arith.constant 5 : i32
    %c0_i32_55 = arith.constant 0 : i32
    %78 = tpu.memref_slice %arg7[%c5_i32_54, %c0_i32_55] : memref<8x256xf32, #tpu.memory_space<vmem>> -> memref<1x256xf32, #tpu.memory_space<vmem>>
    %79 = tpu.memref_slice %arg8[%c5_i32_52] : memref<8x!tpu.dma_semaphore, #tpu.memory_space<semaphore_mem>> -> memref<1x!tpu.dma_semaphore, #tpu.memory_space<semaphore_mem>>
    %80 = tpu.memref_squeeze %79 : memref<1x!tpu.dma_semaphore, #tpu.memory_space<semaphore_mem>> -> memref<!tpu.dma_semaphore, #tpu.memory_space<semaphore_mem>>
    tpu.wait_dma2 semaphore(%80 : memref<!tpu.dma_semaphore, #tpu.memory_space<semaphore_mem>>) src(%77 : memref<1x256xf32, #tpu.memory_space<any>>) dst(%78 : memref<1x256xf32, #tpu.memory_space<vmem>>)
    %c6_i32_56 = arith.constant 6 : i32
    %c0_i32_57 = arith.constant 0 : i32
    %81 = tpu.memref_slice %arg2[%45, %c0_i32_57] : memref<512x256xf32, #tpu.memory_space<any>> -> memref<1x256xf32, #tpu.memory_space<any>>
    %c6_i32_58 = arith.constant 6 : i32
    %c0_i32_59 = arith.constant 0 : i32
    %82 = tpu.memref_slice %arg7[%c6_i32_58, %c0_i32_59] : memref<8x256xf32, #tpu.memory_space<vmem>> -> memref<1x256xf32, #tpu.memory_space<vmem>>
    %83 = tpu.memref_slice %arg8[%c6_i32_56] : memref<8x!tpu.dma_semaphore, #tpu.memory_space<semaphore_mem>> -> memref<1x!tpu.dma_semaphore, #tpu.memory_space<semaphore_mem>>
    %84 = tpu.memref_squeeze %83 : memref<1x!tpu.dma_semaphore, #tpu.memory_space<semaphore_mem>> -> memref<!tpu.dma_semaphore, #tpu.memory_space<semaphore_mem>>
    tpu.wait_dma2 semaphore(%84 : memref<!tpu.dma_semaphore, #tpu.memory_space<semaphore_mem>>) src(%81 : memref<1x256xf32, #tpu.memory_space<any>>) dst(%82 : memref<1x256xf32, #tpu.memory_space<vmem>>)
    %c7_i32_60 = arith.constant 7 : i32
    %c0_i32_61 = arith.constant 0 : i32
    %85 = tpu.memref_slice %arg2[%52, %c0_i32_61] : memref<512x256xf32, #tpu.memory_space<any>> -> memref<1x256xf32, #tpu.memory_space<any>>
    %c7_i32_62 = arith.constant 7 : i32
    %c0_i32_63 = arith.constant 0 : i32
    %86 = tpu.memref_slice %arg7[%c7_i32_62, %c0_i32_63] : memref<8x256xf32, #tpu.memory_space<vmem>> -> memref<1x256xf32, #tpu.memory_space<vmem>>
    %87 = tpu.memref_slice %arg8[%c7_i32_60] : memref<8x!tpu.dma_semaphore, #tpu.memory_space<semaphore_mem>> -> memref<1x!tpu.dma_semaphore, #tpu.memory_space<semaphore_mem>>
    %88 = tpu.memref_squeeze %87 : memref<1x!tpu.dma_semaphore, #tpu.memory_space<semaphore_mem>> -> memref<!tpu.dma_semaphore, #tpu.memory_space<semaphore_mem>>
    tpu.wait_dma2 semaphore(%88 : memref<!tpu.dma_semaphore, #tpu.memory_space<semaphore_mem>>) src(%85 : memref<1x256xf32, #tpu.memory_space<any>>) dst(%86 : memref<1x256xf32, #tpu.memory_space<vmem>>)
    %c0 = arith.constant 0 : index
    %c0_64 = arith.constant 0 : index
    %89 = vector.load %arg7[%c0, %c0_64] : memref<8x256xf32, #tpu.memory_space<vmem>>, vector<8x256xf32>
    %c0_65 = arith.constant 0 : index
    %c0_66 = arith.constant 0 : index
    %90 = vector.load %arg3[%c0_65, %c0_66] : memref<8x256xf32, #tpu.memory_space<vmem>>, vector<8x256xf32>
    %91 = arith.addf %89, %90 : vector<8x256xf32>
    %cst = arith.constant dense<0.000000e+00> : vector<8xf32>
    %92 = vector.multi_reduction <add>, %91, %cst [1] : vector<8x256xf32> to vector<8xf32>
    %93 = vector.shape_cast %92 : vector<8xf32> to vector<8x1xf32>
    %cst_67 = arith.constant 2.560000e+02 : f32
    %94 = vector.broadcast %cst_67 : f32 to vector<8x1xf32>
    %95 = arith.divf %93, %94 : vector<8x1xf32>
    %96 = vector.broadcast %95 : vector<8x1xf32> to vector<8x256xf32>
    %97 = arith.subf %91, %96 : vector<8x256xf32>
    %98 = arith.mulf %97, %97 : vector<8x256xf32>
    %cst_68 = arith.constant dense<0.000000e+00> : vector<8xf32>
    %99 = vector.multi_reduction <add>, %98, %cst_68 [1] : vector<8x256xf32> to vector<8xf32>
    %100 = vector.shape_cast %99 : vector<8xf32> to vector<8x1xf32>
    %cst_69 = arith.constant 2.560000e+02 : f32
    %101 = vector.broadcast %cst_69 : f32 to vector<8x1xf32>
    %102 = arith.divf %100, %101 : vector<8x1xf32>
    %cst_70 = arith.constant 9.99999996E-13 : f32
    %103 = vector.broadcast %cst_70 : f32 to vector<8x1xf32>
    %104 = arith.addf %102, %103 : vector<8x1xf32>
    %105 = math.rsqrt %104 : vector<8x1xf32>
    %106 = vector.broadcast %105 : vector<8x1xf32> to vector<8x256xf32>
    %107 = arith.mulf %97, %106 : vector<8x256xf32>
    %c0_71 = arith.constant 0 : index
    %c0_72 = arith.constant 0 : index
    %108 = vector.load %arg4[%c0_71, %c0_72] : memref<1x256xf32, #tpu.memory_space<vmem>>, vector<1x256xf32>
    %109 = vector.broadcast %108 : vector<1x256xf32> to vector<8x256xf32>
    %110 = arith.mulf %107, %109 : vector<8x256xf32>
    %c0_73 = arith.constant 0 : index
    %c0_74 = arith.constant 0 : index
    %111 = vector.load %arg5[%c0_73, %c0_74] : memref<1x256xf32, #tpu.memory_space<vmem>>, vector<1x256xf32>
    %112 = vector.broadcast %111 : vector<1x256xf32> to vector<8x256xf32>
    %113 = arith.addf %110, %112 : vector<8x256xf32>
    %114 = arith.truncf %113 : vector<8x256xf32> to vector<8x256xbf16>
    %c0_75 = arith.constant 0 : index
    %c0_76 = arith.constant 0 : index
    %115 = vector.load %arg6[%c0_75, %c0_76] : memref<8x256xbf16, #tpu.memory_space<vmem>>, vector<8x256xbf16>
    tpu.vector_store %arg6[%c0_75, %c0_76], %114 {strides = array<i32>} : memref<8x256xbf16, #tpu.memory_space<vmem>>, vector<8x256xbf16>,
    return
  }
  func.func @transform_1(%arg0: i32, %arg1: memref<16xi32, #tpu.memory_space<smem>>) -> (i32, i32) {
    %c1_i32 = arith.constant 1 : i32
    %c0_i32 = arith.constant 0 : i32
    %0 = arith.cmpi eq, %c1_i32, %c0_i32 : i32
    %c1_i32_0 = arith.constant 1 : i32
    %1 = arith.select %0, %c1_i32_0, %c1_i32 : i32
    %2 = arith.remsi %arg0, %1 : i32
    %c0_i32_1 = arith.constant 0 : i32
    %3 = arith.cmpi ne, %2, %c0_i32_1 : i32
    %c0_i32_2 = arith.constant 0 : i32
    %4 = arith.cmpi slt, %2, %c0_i32_2 : i32
    %c0_i32_3 = arith.constant 0 : i32
    %5 = arith.cmpi slt, %1, %c0_i32_3 : i32
    %6 = arith.xori %4, %5 : i1
    %7 = arith.andi %6, %3 : i1
    %8 = arith.addi %2, %1 : i32
    %9 = arith.select %7, %8, %2 : i32
    %c0_i32_4 = arith.constant 0 : i32
    %c0_i32_5 = arith.constant 0 : i32
    return %9, %c0_i32_4 : i32, i32
  }
  func.func @transform_2(%arg0: i32, %arg1: memref<16xi32, #tpu.memory_space<smem>>) -> (i32, i32) {
    %c0_i32 = arith.constant 0 : i32
    %c0_i32_0 = arith.constant 0 : i32
    %c0_i32_1 = arith.constant 0 : i32
    return %c0_i32, %c0_i32_0 : i32, i32
  }
  func.func @transform_3(%arg0: i32, %arg1: memref<16xi32, #tpu.memory_space<smem>>) -> (i32, i32) {
    %c0_i32 = arith.constant 0 : i32
    %c0_i32_0 = arith.constant 0 : i32
    %c0_i32_1 = arith.constant 0 : i32
    return %c0_i32, %c0_i32_0 : i32, i32
  }
  func.func @transform_4(%arg0: i32, %arg1: memref<16xi32, #tpu.memory_space<smem>>) -> (i32, i32) {
    %c0_i32 = arith.constant 0 : i32
    %c0_i32_0 = arith.constant 0 : i32
    return %arg0, %c0_i32 : i32, i32
  }
}

</mosaic_0001>

<llo_original>
// kernel: tpu_custom_call.1
$region0: #{tpu_custom_call.1}
  #allocation0 [shape = 'u32[]', space=smem, size = 0x4, offset = 0x4, fixed_abs, tag = 'smem constant byte address 0x4 - core index']
  #allocation1 [shape = 'u32[144,128]{1,0:T(1,128)}', space=vmem, size = 0x12000, scoped, tag = 'internal scratch']
  #allocation2 [shape = 'f32[8,256]{1,0:T(8,128)}', space=vmem, size = 0x2000, scoped, tag = 'scratch operand']
  #allocation3 [shape = 's32[8]{0}', space=sflag, size = 0x20, scoped, tag = 'scratch operand']
  #allocation4 [shape = 's32[1]{0}', space=sflag, size = 0x4, scoped, tag = 'scoped memory for tpu_custom_call.1']
  #allocation5 [shape = 'u8[512]{0}', space=smem, size = 0x200, scoped, tag = 'prefetched SMEM operand 0']
  #allocation10 [shape = 's32[]', space=sflag, size = 0x4, offset = 0, fixed_abs, tag = 'sflag constant byte address 0x0 - dummy sync flag']
  #allocation11 [shape = 's32[]', space=sflag, size = 0x4, offset = 0, fixed_abs, tag = 'sflag constant byte address 0x0 - dummy sync flag']
  #allocation12 [shape = 's32[]', space=sflag, size = 0x4, offset = 0, fixed_abs, tag = 'sflag constant byte address 0x0 - dummy sync flag']
  #allocation13 [shape = 's32[]', space=sflag, size = 0x4, offset = 0, fixed_abs, tag = 'sflag constant byte address 0x0 - dummy sync flag']
  #allocation14 [shape = 's32[]', space=sflag, size = 0x4, offset = 0, fixed_abs, tag = 'sflag constant byte address 0x0 - dummy sync flag']
  #allocation15 [shape = 's32[]', space=sflag, size = 0x4, offset = 0, fixed_abs, tag = 'sflag constant byte address 0x0 - dummy sync flag']
  #allocation16 [shape = 's32[]', space=sflag, size = 0x4, offset = 0, fixed_abs, tag = 'sflag constant byte address 0x0 - dummy sync flag']
  #allocation17 [shape = 's32[]', space=sflag, size = 0x4, offset = 0, fixed_abs, tag = 'sflag constant byte address 0x0 - dummy sync flag']
  %s0 = inlined_call_operand.hbm [shape: s32[16], index: 0, kind: input, shape index: {}]
  %s1 = inlined_call_operand.hbm [shape: f32[512,256], index: 1, kind: input, shape index: {}]
  %s2 = inlined_call_operand.hbm [shape: f32[8,256], index: 2, kind: input, shape index: {}]
  %s3 = inlined_call_operand.vmem [shape: f32[1,256], index: 3, kind: input, shape index: {}]
  %s4 = inlined_call_operand.vmem [shape: f32[1,256], index: 4, kind: input, shape index: {}]
  %s5 = inlined_call_operand.hbm [shape: bf16[16,256], index: 5, kind: output, shape index: {}]
  %s6 = sld [smem:[#allocation0]]
  $region49: #{tpu_custom_call.1} parent=0
    _
  %s8 = ssub.s32 1, %s6
  %s9 = scalar_select 0, %s8, %s6
  %11 = dma.hbm_to_smem %s0, 16, [#allocation5], [#allocation4]
  %12 = dma.done [#allocation4], 16
  %13 = sfence
  $region1: #{tpu_custom_call.1} parent=0
    #allocation6 [shape = 'u8[8192]{0}', space=vmem, size = 0x2000, scoped, tag = 'input window, operand 2, single buffered']
    #allocation7 [shape = 's32[2]{0}', space=sflag, size = 0x8, scoped, tag = 'scoped memory for tpu_custom_call.1']
    #allocation8 [shape = 's32[2]{0}', space=sflag, size = 0x8, scoped, tag = 'scoped memory for tpu_custom_call.1']
    #allocation9 [shape = 'u8[8192]{0}', space=vmem, size = 0x2000, scoped, tag = 'output window, operand 0']
    %14 = vsyncpa [#allocation7], 0
    %15 = vsyncpa [#allocation8], 0
    %s16 = scalar_lea.sflag [#allocation8], 1
    %17 = vsyncpa %s16, 0
    loop: start=0, step=1, limit=4
    $region2: #{tpu_custom_call.1} parent=1 // loop_pre_header
      _
    $region3: #{tpu_custom_call.1} parent=1 // loop_header
      %s19 = sphi 0, %s23
      %p20 = scmp.ge.s32.totalorder %s19, 4
      %s27 = sphi 0, %s27
      %s29 = sphi 0, %s27
      %s30 = sphi 0, %s29
      %s44 = sphi 0, %s30
      %s48 = sphi 0, %s48
      %s50 = sphi 0, %s48
      %s51 = sphi 0, %s50
      %s65 = sphi 0, %s51
      %s69 = sphi 0, %s69
      %s71 = sphi 0, %s69
      %s72 = sphi 0, %s71
      %s86 = sphi 0, %s72
      %s92 = sphi 0, %s94
      %s95 = sphi 0, %s92
      %s96 = sphi 0, %s95
      %s112 = sphi 0, %s96
    $region4: #{tpu_custom_call.1} parent=1 // loop_header_branch
      %22 = sbr.rel (%p20) target = $region8
    $region5: #{tpu_custom_call.1} parent=1 // loop_body
      %s24 = ssub.s32 %s19, 1
      %s25 = ssub.s32 %s19, 2
      %s26 = sadd.s32 %s19, 1
      %s28 = sadd.s32 %s27, 1
      %p31 = scmp.eq.s32.totalorder %s19, 1
      %p32 = scmp.ne.s32.totalorder %s27, %s29
      %p33 = scmp.eq.s32.totalorder %s19, 0
      %p34 = por %p32, %p33
      %p35 = scmp.ne.s32.totalorder %s27, %s29
      %p36 = scmp.eq.s32.totalorder %s24, 1
      %p37 = por %p35, %p36
      %p38 = scmp.ne.s32.totalorder %s29, %s30
      %p39 = scmp.eq.s32.totalorder %s24, 0
      %p40 = por %p38, %p39
      %p41 = scmp.ne.s32.totalorder %s29, %s30
      %p42 = scmp.eq.s32.totalorder %s25, 1
      %p43 = por %p41, %p42
      %p45 = scmp.ne.s32.totalorder %s30, %s44
      %p46 = scmp.eq.s32.totalorder %s25, 0
      %p47 = por %p45, %p46
      %s49 = sadd.s32 %s48, 1
      %p52 = scmp.eq.s32.totalorder %s19, 1
      %p53 = scmp.ne.s32.totalorder %s48, %s50
      %p54 = scmp.eq.s32.totalorder %s19, 0
      %p55 = por %p53, %p54
      %p56 = scmp.ne.s32.totalorder %s48, %s50
      %p57 = scmp.eq.s32.totalorder %s24, 1
      %p58 = por %p56, %p57
      %p59 = scmp.ne.s32.totalorder %s50, %s51
      %p60 = scmp.eq.s32.totalorder %s24, 0
      %p61 = por %p59, %p60
      %p62 = scmp.ne.s32.totalorder %s50, %s51
      %p63 = scmp.eq.s32.totalorder %s25, 1
      %p64 = por %p62, %p63
      %p66 = scmp.ne.s32.totalorder %s51, %s65
      %p67 = scmp.eq.s32.totalorder %s25, 0
      %p68 = por %p66, %p67
      %s70 = sadd.s32 %s69, 1
      %p73 = scmp.eq.s32.totalorder %s19, 1
      %p74 = scmp.ne.s32.totalorder %s69, %s71
      %p75 = scmp.eq.s32.totalorder %s19, 0
      %p76 = por %p74, %p75
      %p77 = scmp.ne.s32.totalorder %s69, %s71
      %p78 = scmp.eq.s32.totalorder %s24, 1
      %p79 = por %p77, %p78
      %p80 = scmp.ne.s32.totalorder %s71, %s72
      %p81 = scmp.eq.s32.totalorder %s24, 0
      %p82 = por %p80, %p81
      %p83 = scmp.ne.s32.totalorder %s71, %s72
      %p84 = scmp.eq.s32.totalorder %s25, 1
      %p85 = por %p83, %p84
      %p87 = scmp.ne.s32.totalorder %s72, %s86
      %p88 = scmp.eq.s32.totalorder %s25, 0
      %p89 = por %p87, %p88
      %s90 = ssub.s32 %s19, %s26
      %p91 = scmp.eq.s32.totalorder %s90, 0
      %s93 = sadd.s32 %s92, 1
      %s94 = scalar_select %p91, %s92, %s93
      %p97 = pneg %p91
      %p98 = scmp.eq.s32.totalorder %s19, 1
      %p99 = por %p97, %p98
      %p100 = scmp.ne.s32.totalorder %s92, %s95
      %p101 = scmp.eq.s32.totalorder %s19, 0
      %p102 = por %p100, %p101
      %p103 = scmp.ne.s32.totalorder %s92, %s95
      %p104 = scmp.eq.s32.totalorder %s24, 1
      %p105 = por %p103, %p104
      %p106 = scmp.ne.s32.totalorder %s95, %s96
      %p107 = scmp.eq.s32.totalorder %s24, 0
      %p108 = por %p106, %p107
      %p109 = scmp.ne.s32.totalorder %s95, %s96
      %p110 = scmp.eq.s32.totalorder %s25, 1
      %p111 = por %p109, %p110
      %p113 = scmp.ne.s32.totalorder %s96, %s112
      %p114 = scmp.eq.s32.totalorder %s25, 0
      %p115 = por %p113, %p114
      %p116 = scmp.le.s32.totalorder 1, %s19
      %p117 = scmp.lt.s32.totalorder %s19, 3
      %p118 = pnand %p116, %p117
      %p119 = pneg %p118
      // Predicated region
      $region9: #{tpu_custom_call.1} parent=5 // pred_check
        _
      $region10: #{tpu_custom_call.1} parent=5 // pred_check_branch
        %121 = sbr.rel (%p118) target = $region12
      $region11: #{tpu_custom_call.1} parent=5 // pred_region
        %s122 = ssub.s32 %s19, 1
        // Predicated region
        $region13: #{tpu_custom_call.1} parent=11 // pred_check
          %p123 = pneg %p40
        $region14: #{tpu_custom_call.1} parent=11 // pred_check_branch
          %125 = sbr.rel (%p123) target = $region16
        $region15: #{tpu_custom_call.1} parent=11 // pred_region
          %s127 = ssub.s32 256, 256
          %128 = vsyncadd [#allocation7], %s127
          %s130 = sshll.u32 [#allocation6], 4
          %s131 = int_to_ptr.vmem [resolvable:$true] %s130
          %133 = dma.hbm_to_vmem [thread:$0]  %s2, 256, %s131, [#allocation7]
        $region16: #{tpu_custom_call.1} parent=11 // pred_fallthru
          _
        // Predicated region
        $region17: #{tpu_custom_call.1} parent=11 // pred_check
          %p134 = pneg %p61
        $region18: #{tpu_custom_call.1} parent=11 // pred_check_branch
          %136 = sbr.rel (%p134) target = $region20
        $region19: #{tpu_custom_call.1} parent=11 // pred_region
          _
        $region20: #{tpu_custom_call.1} parent=11 // pred_fallthru
          _
        // Predicated region
        $region21: #{tpu_custom_call.1} parent=11 // pred_check
          %p137 = pneg %p82
        $region22: #{tpu_custom_call.1} parent=11 // pred_check_branch
          %139 = sbr.rel (%p137) target = $region24
        $region23: #{tpu_custom_call.1} parent=11 // pred_region
          _
        $region24: #{tpu_custom_call.1} parent=11 // pred_fallthru
          _
      $region12: #{tpu_custom_call.1} parent=5 // pred_fallthru
        _
      %p140 = scmp.lt.s32.totalorder %s19, 2
      // Predicated region
      $region25: #{tpu_custom_call.1} parent=5 // pred_check
        %p141 = pneg %p140
      $region26: #{tpu_custom_call.1} parent=5 // pred_check_branch
        %143 = sbr.rel (%p141) target = $region28
      $region27: #{tpu_custom_call.1} parent=5 // pred_region
        _
      $region28: #{tpu_custom_call.1} parent=5 // pred_fallthru
        _
      %p144 = scmp.le.s32.totalorder 1, %s19
      %p145 = scmp.lt.s32.totalorder %s19, 3
      %p146 = pnand %p144, %p145
      %p147 = pneg %p146
      // Predicated region
      $region29: #{tpu_custom_call.1} parent=5 // pred_check
        _
      $region30: #{tpu_custom_call.1} parent=5 // pred_check_branch
        %149 = sbr.rel (%p146) target = $region32
      $region31: #{tpu_custom_call.1} parent=5 // pred_region
        %s150 = ssub.s32 %s19, 1
        // Predicated region
        $region33: #{tpu_custom_call.1} parent=31 // pred_check
          %p151 = pneg %p40
        $region34: #{tpu_custom_call.1} parent=31 // pred_check_branch
          %153 = sbr.rel (%p151) target = $region36
        $region35: #{tpu_custom_call.1} parent=31 // pred_region
          %154 = dma.done [#allocation7], 256
        $region36: #{tpu_custom_call.1} parent=31 // pred_fallthru
          _
        %p155 = pneg %p40
        %p156 = pneg %p37
        %p157 = pneg %p61
        %p158 = pneg %p58
        %p159 = pneg %p82
        %p160 = pneg %p79
        %p161 = pneg %p108
        %p162 = pneg %p105
        %s163 = sand.u32 %s95, 1
        %s164 = scalar_lea.sflag [#allocation8], %s163
        %s165 = sand.u32 %s95, 1
        %s166 = smul.addr %s165, 8
        %s167 = scalar_lea.vmem [#allocation9], %s166
        %s168 = smul.u32 %s24, 8
        %s169 = sld [smem:[#allocation5 + %s168]]
        %s170 = sshrl.u32 %s169, 3
        %s171 = sand.u32 %s169, 7
        %s172 = smul.u32 %s170, 16
        %s173 = sadd.s32 %s171, %s172
        %s174 = smul.addr %s173, 16
        %s175 = scalar_lea.hbm %s1, %s174
        %s177 = sshll.u32 [#allocation2], 4
        %s178 = int_to_ptr.vmem [resolvable:$true] %s177
        %180 = dma.hbm_to_vmem [thread:$0]  %s175, 32, %s178, [#allocation3], 128, 128, 1
        %s181 = sadd.s32 %s168, 1
        %s182 = sld [smem:[#allocation5 + %s181]]
        %s183 = sshrl.u32 %s182, 3
        %s184 = sand.u32 %s182, 7
        %s185 = smul.u32 %s183, 16
        %s186 = sadd.s32 %s184, %s185
        %s187 = smul.addr %s186, 16
        %s188 = scalar_lea.hbm %s1, %s187
        %s189 = scalar_lea.vmem [#allocation2], 1
        %s190 = scalar_lea.sflag [#allocation3], 1
        %s192 = sshll.u32 %s189, 4
        %s193 = int_to_ptr.vmem [resolvable:$true] %s192
        %195 = dma.hbm_to_vmem [thread:$0]  %s188, 32, %s193, %s190, 128, 128, 1
        %s196 = sadd.s32 %s168, 2
        %s197 = sld [smem:[#allocation5 + %s196]]
        %s198 = sshrl.u32 %s197, 3
        %s199 = sand.u32 %s197, 7
        %s200 = smul.u32 %s198, 16
        %s201 = sadd.s32 %s199, %s200
        %s202 = smul.addr %s201, 16
        %s203 = scalar_lea.hbm %s1, %s202
        %s204 = scalar_lea.vmem [#allocation2], 2
        %s205 = scalar_lea.sflag [#allocation3], 2
        %s207 = sshll.u32 %s204, 4
        %s208 = int_to_ptr.vmem [resolvable:$true] %s207
        %210 = dma.hbm_to_vmem [thread:$0]  %s203, 32, %s208, %s205, 128, 128, 1
        %s211 = sadd.s32 %s168, 3
        %s212 = sld [smem:[#allocation5 + %s211]]
        %s213 = sshrl.u32 %s212, 3
        %s214 = sand.u32 %s212, 7
        %s215 = smul.u32 %s213, 16
        %s216 = sadd.s32 %s214, %s215
        %s217 = smul.addr %s216, 16
        %s218 = scalar_lea.hbm %s1, %s217
        %s219 = scalar_lea.vmem [#allocation2], 3
        %s220 = scalar_lea.sflag [#allocation3], 3
        %s222 = sshll.u32 %s219, 4
        %s223 = int_to_ptr.vmem [resolvable:$true] %s222
        %225 = dma.hbm_to_vmem [thread:$0]  %s218, 32, %s223, %s220, 128, 128, 1
        %s226 = sadd.s32 %s168, 4
        %s227 = sld [smem:[#allocation5 + %s226]]
        %s228 = sshrl.u32 %s227, 3
        %s229 = sand.u32 %s227, 7
        %s230 = smul.u32 %s228, 16
        %s231 = sadd.s32 %s229, %s230
        %s232 = smul.addr %s231, 16
        %s233 = scalar_lea.hbm %s1, %s232
        %s234 = scalar_lea.vmem [#allocation2], 4
        %s235 = scalar_lea.sflag [#allocation3], 4
        %s237 = sshll.u32 %s234, 4
        %s238 = int_to_ptr.vmem [resolvable:$true] %s237
        %240 = dma.hbm_to_vmem [thread:$0]  %s233, 32, %s238, %s235, 128, 128, 1
        %s241 = sadd.s32 %s168, 5
        %s242 = sld [smem:[#allocation5 + %s241]]
        %s243 = sshrl.u32 %s242, 3
        %s244 = sand.u32 %s242, 7
        %s245 = smul.u32 %s243, 16
        %s246 = sadd.s32 %s244, %s245
        %s247 = smul.addr %s246, 16
        %s248 = scalar_lea.hbm %s1, %s247
        %s249 = scalar_lea.vmem [#allocation2], 5
        %s250 = scalar_lea.sflag [#allocation3], 5
        %s252 = sshll.u32 %s249, 4
        %s253 = int_to_ptr.vmem [resolvable:$true] %s252
        %255 = dma.hbm_to_vmem [thread:$0]  %s248, 32, %s253, %s250, 128, 128, 1
        %s256 = sadd.s32 %s168, 6
        %s257 = sld [smem:[#allocation5 + %s256]]
        %s258 = sshrl.u32 %s257, 3
        %s259 = sand.u32 %s257, 7
        %s260 = smul.u32 %s258, 16
        %s261 = sadd.s32 %s259, %s260
        %s262 = smul.addr %s261, 16
        %s263 = scalar_lea.hbm %s1, %s262
        %s264 = scalar_lea.vmem [#allocation2], 6
        %s265 = scalar_lea.sflag [#allocation3], 6
        %s267 = sshll.u32 %s264, 4
        %s268 = int_to_ptr.vmem [resolvable:$true] %s267
        %270 = dma.hbm_to_vmem [thread:$0]  %s263, 32, %s268, %s265, 128, 128, 1
        %s271 = sadd.s32 %s168, 7
        %s272 = sld [smem:[#allocation5 + %s271]]
        %s273 = sshrl.u32 %s272, 3
        %s274 = sand.u32 %s272, 7
        %s275 = smul.u32 %s273, 16
        %s276 = sadd.s32 %s274, %s275
        %s277 = smul.addr %s276, 16
        %s278 = scalar_lea.hbm %s1, %s277
        %s279 = scalar_lea.vmem [#allocation2], 7
        %s280 = scalar_lea.sflag [#allocation3], 7
        %s282 = sshll.u32 %s279, 4
        %s283 = int_to_ptr.vmem [resolvable:$true] %s282
        %285 = dma.hbm_to_vmem [thread:$0]  %s278, 32, %s283, %s280, 128, 128, 1
        %s286 = smul.u32 1, 2
        %s287 = sshll.u32 %s286, 4
        %288 = dma.done [#allocation3], %s287
        %s289 = sshll.u32 %s286, 4
        %290 = dma.done %s190, %s289
        %s291 = sshll.u32 %s286, 4
        %292 = dma.done %s205, %s291
        %s293 = sshll.u32 %s286, 4
        %294 = dma.done %s220, %s293
        %s295 = sshll.u32 %s286, 4
        %296 = dma.done %s235, %s295
        %s297 = sshll.u32 %s286, 4
        %298 = dma.done %s250, %s297
        %s299 = sshll.u32 %s286, 4
        %300 = dma.done %s265, %s299
        %s301 = sshll.u32 %s286, 4
        %302 = dma.done %s280, %s301
        %v303 = vld [vmem:[#allocation2] sm:$0xff]
        %v304 = vld [vmem:[#allocation2 + $0x8] sm:$0xff]
        %v305 = vld [vmem:[#allocation6] sm:$0xff]
        %v306 = vld [vmem:[#allocation6 + $0x8] sm:$0xff]
        %v307 = vadd.f32 %v303, %v305
        %v308 = vadd.f32 %v304, %v306
        %v309 = vadd.f32 %v307, %v308
        %310 = vadd.xlane.f32.xlu0 %v309
        %v311 = vpop.xlane.xlu0 %310
        %v312 = vrcp.pop 256.0
        %v313 = vmul.f32 %v311, %v312
        %v314 = vsub.f32 %v307, %v313
        %v315 = vsub.f32 %v308, %v313
        %v316 = vmul.f32 %v314, %v314
        %v317 = vmul.f32 %v315, %v315
        %v318 = vadd.f32 %v316, %v317
        %319 = vadd.xlane.f32.xlu0 %v318
        %v320 = vpop.xlane.xlu0 %319
        %v321 = vmul.f32 %v320, %v312
        %v322 = vadd.f32 %v321, 1e-12
        %v323 = vrsqrt.pop %v322
        %v324 = vmul.f32 %v314, %v323
        %v325 = vmul.f32 %v315, %v323
        %v326 = vld [vmem:[%s3] sm:$0x3]
        %v328 = vlaneseq
        %v329 = vshrl.u32 %v328, 7
        %v330 = vsub.s32 0, %v329
        %v331 = vrot.slane %v326, %v330
        %v332 = vlaneseq
        %v333 = vshrl.u32 %v332, 7
        %v334 = vsub.s32 1, %v333
        %v335 = vrot.slane %v326, %v334
        %v338 = vmul.f32 %v324, %v331
        %v339 = vmul.f32 %v325, %v335
        %v340 = vld [vmem:[%s4] sm:$0x3]
        %v342 = vlaneseq
        %v343 = vshrl.u32 %v342, 7
        %v344 = vsub.s32 0, %v343
        %v345 = vrot.slane %v340, %v344
        %v346 = vlaneseq
        %v347 = vshrl.u32 %v346, 7
        %v348 = vsub.s32 1, %v347
        %v349 = vrot.slane %v340, %v348
        %v352 = vadd.f32 %v338, %v345
        %v353 = vadd.f32 %v339, %v349
        %v354 = vpack.c.bf16 %v352, %v352
        %v355 = vpack.c.bf16 %v353, %v353
        %v358 = vunpack.c.l.b16 %v354
        %v359 = vunpack.c.l.b16 %v355
        %v360 = vpack.c.b16 %v359, %v358
        %362 = vst [vmem:[%s167] sm:$0xff] %v360
        %s363 = sand.u32 %s95, 1
        %s364 = scalar_lea.sflag [#allocation8], %s363
        %s365 = sand.u32 %s95, 1
        %s366 = smul.addr %s365, 8
        %s367 = scalar_lea.vmem [#allocation9], %s366
        // Predicated region
        $region37: #{tpu_custom_call.1} parent=31 // pred_check
          %p368 = pneg %p105
        $region38: #{tpu_custom_call.1} parent=31 // pred_check_branch
          %370 = sbr.rel (%p368) target = $region40
        $region39: #{tpu_custom_call.1} parent=31 // pred_region
          %s372 = ssub.s32 128, 128
          %373 = vsyncadd %s364, %s372
          %s374 = smul.addr %s24, 2
          %s375 = smul.addr %s374, 64
          %s376 = scalar_lea.hbm %s5, %s375
          %s378 = sshll.u32 %s367, 4
          %s379 = int_to_ptr.vmem [resolvable:$true] %s378
          %381 = dma.vmem_to_hbm [thread:$0]  %s379, 128, %s376, %s364
        $region40: #{tpu_custom_call.1} parent=31 // pred_fallthru
          _
      $region32: #{tpu_custom_call.1} parent=5 // pred_fallthru
        _
      %p382 = scmp.le.s32.totalorder 2, %s19
      // Predicated region
      $region41: #{tpu_custom_call.1} parent=5 // pred_check
        %p383 = pneg %p382
      $region42: #{tpu_custom_call.1} parent=5 // pred_check_branch
        %385 = sbr.rel (%p383) target = $region44
      $region43: #{tpu_custom_call.1} parent=5 // pred_region
        %s386 = ssub.s32 %s19, 2
        // Predicated region
        $region45: #{tpu_custom_call.1} parent=43 // pred_check
          %p387 = pneg %p111
        $region46: #{tpu_custom_call.1} parent=43 // pred_check_branch
          %389 = sbr.rel (%p387) target = $region48
        $region47: #{tpu_custom_call.1} parent=43 // pred_region
          %s390 = sand.u32 %s96, 1
          %s391 = scalar_lea.sflag [#allocation8], %s390
          %s392 = sand.u32 %s96, 1
          %s393 = smul.addr %s392, 8
          %s394 = scalar_lea.vmem [#allocation9], %s393
          %395 = dma.done %s391, 128
        $region48: #{tpu_custom_call.1} parent=43 // pred_fallthru
          _
      $region44: #{tpu_custom_call.1} parent=5 // pred_fallthru
        _
    $region6: #{tpu_custom_call.1} parent=1 // loop_footer
      %s23 = sadd.s32 1, %s19
    $region7: #{tpu_custom_call.1} parent=1 // loop_footer_branch
      %18 = sbr.rel target = $region3
    $region8: #{tpu_custom_call.1} parent=1 // loop_exit
      _
    %396 = vsyncpa [#allocation7], 1
    %s397 = scalar_lea.sflag [#allocation7], 1
    %398 = vsyncpa %s397, 1
    %399 = vsyncpa [#allocation8], 1
    %s400 = scalar_lea.sflag [#allocation8], 1
    %401 = vsyncpa %s400, 1
  %402 = vsyncmov [#allocation3]
  %s403 = vpop.sfrf %402
  %p404 = scmp.eq.s32.totalorder %s403, 0
  %p405 = pneg %p404
  %407 = shalt.err (%p405)
  %s408 = scalar_lea.sflag [#allocation3], 1
  %409 = vsyncmov %s408
  %s410 = vpop.sfrf %409
  %p411 = scmp.eq.s32.totalorder %s410, 0
  %p412 = pneg %p411
  %414 = shalt.err (%p412)
  %s415 = scalar_lea.sflag [#allocation3], 2
  %416 = vsyncmov %s415
  %s417 = vpop.sfrf %416
  %p418 = scmp.eq.s32.totalorder %s417, 0
  %p419 = pneg %p418
  %421 = shalt.err (%p419)
  %s422 = scalar_lea.sflag [#allocation3], 3
  %423 = vsyncmov %s422
  %s424 = vpop.sfrf %423
  %p425 = scmp.eq.s32.totalorder %s424, 0
  %p426 = pneg %p425
  %428 = shalt.err (%p426)
  %s429 = scalar_lea.sflag [#allocation3], 4
  %430 = vsyncmov %s429
  %s431 = vpop.sfrf %430
  %p432 = scmp.eq.s32.totalorder %s431, 0
  %p433 = pneg %p432
  %435 = shalt.err (%p433)
  %s436 = scalar_lea.sflag [#allocation3], 5
  %437 = vsyncmov %s436
  %s438 = vpop.sfrf %437
  %p439 = scmp.eq.s32.totalorder %s438, 0
  %p440 = pneg %p439
  %442 = shalt.err (%p440)
  %s443 = scalar_lea.sflag [#allocation3], 6
  %444 = vsyncmov %s443
  %s445 = vpop.sfrf %444
  %p446 = scmp.eq.s32.totalorder %s445, 0
  %p447 = pneg %p446
  %449 = shalt.err (%p447)
  %s450 = scalar_lea.sflag [#allocation3], 7
  %451 = vsyncmov %s450
  %s452 = vpop.sfrf %451
  %p453 = scmp.eq.s32.totalorder %s452, 0
  %p454 = pneg %p453
  %456 = shalt.err (%p454)

</llo_original>
